<compile_context>
chip_gen: v6e
topology: v6e:2x2x1
jax: 0.10.0
libtpu: 0.0.40
codegen_flags: <defaults>
</compile_context>

<pallas_src>
import jax
import jax.numpy as jnp
from jax import lax
from jax.experimental import pallas as pl
from jax.experimental.pallas import tpu as pltpu

IN_DIM = 1152   # 9 * 128 -> lane-aligned
HID = 256
OUT = 10
BN_EPS = 1e-5
SP_THRESH = 20.0            # torch.nn.Softplus threshold
_VMEM_LIMIT = 32 * 1024 * 1024   # explicit scoped-VMEM request (safe on v5e/v6e/v7x)


def _softplus(h):
    return jnp.where(h > SP_THRESH, h, jnp.log1p(jnp.exp(jnp.minimum(h, SP_THRESH))))


def _softmax(z):
    z = z - jnp.max(z, axis=-1, keepdims=True)
    e = jnp.exp(z)
    return e / jnp.sum(e, axis=-1, keepdims=True)


# --------------------------------------------------------------------------- #
# Fused single-call path (small / medium B), K-split fc1 with VMEM accumulator.
# Grid axis = reduction over K chunks ('arbitrary'); output resident across it.
# --------------------------------------------------------------------------- #
def _fused_kernel(x_ref, w1_ref, g_ref, beta_ref, w2_ref, b2_ref, o_ref, acc_ref):
    k = pl.program_id(0)

    @pl.when(k == 0)
    def _():
        acc_ref[...] = jnp.zeros_like(acc_ref)

    # fc1 partial matmul on the MXU (fc1 bias intentionally omitted: it cancels
    # exactly under training-mode BatchNorm's mean subtraction).
    acc_ref[...] += jnp.dot(x_ref[...].astype(w1_ref.dtype), w1_ref[...],
                            preferred_element_type=jnp.float32)

    @pl.when(k == pl.num_programs(0) - 1)
    def _():
        h = acc_ref[...]
        # BatchNorm1d(256), training-mode (batch mean, biased variance), centered
        # formula; affine folded into a single scale so normalization is one FMA.
        mean = jnp.mean(h, axis=0, keepdims=True)
        d = h - mean
        var = jnp.mean(d * d, axis=0, keepdims=True)
        scale = g_ref[...] * lax.rsqrt(var + BN_EPS)
        hn = d * scale + beta_ref[...]
        sp = _softplus(hn)
        z = jnp.dot(sp, w2_ref[...], preferred_element_type=jnp.float32) + b2_ref[...]
        o_ref[...] = _softmax(z)


# --------------------------------------------------------------------------- #
# Batch-tiled two-pass path (large B).
#   Pass 1: fc1 per tile (h stored in h_dtype, bf16 by default) + f32 BN partial
#           sums/sum-of-squares merged into one (nt, 2, HID) output.
#   Pass 2: folded BN (scale/shift) + Softplus + fc2 + softmax per tile.
# --------------------------------------------------------------------------- #
def _fc1_stats_kernel(x_ref, w1_ref, h_ref, stats_ref):
    h = jnp.dot(x_ref[...].astype(w1_ref.dtype), w1_ref[...],
                preferred_element_type=jnp.float32)
    h_ref[...] = h.astype(h_ref.dtype)
    s = jnp.sum(h, axis=0, keepdims=True)        # (1, HID)
    sq = jnp.sum(h * h, axis=0, keepdims=True)   # (1, HID)
    stats_ref[...] = jnp.concatenate([s, sq], axis=0).reshape(1, 2, HID)


def _bn_act_fc2_kernel(h_ref, scale_ref, shift_ref, w2_ref, b2_ref, o_ref):
    # Folded BatchNorm: single multiply-add per element (in f32).
    h = h_ref[...].astype(jnp.float32) * scale_ref[...] + shift_ref[...]
    sp = _softplus(h)
    z = jnp.dot(sp, w2_ref[...], preferred_element_type=jnp.float32) + b2_ref[...]
    o_ref[...] = _softmax(z)


# --------------------------------------------------------------------------- #
# Wrapper
# --------------------------------------------------------------------------- #
def word_recognizer(x, w1, b1, gamma, beta, w2, b2, *,
                    fc1_dtype=jnp.bfloat16, h_dtype=jnp.bfloat16,
                    fused_max_b=4096, block_b=512, fc1_block_k=384):
    """Forward pass of WordRecognizer.

    fc1_dtype:   dtype of the fc1 matmul inputs (bf16 halves the dominant w1 HBM
                 transfer; f32 reproduces PyTorch numerics exactly).
    h_dtype:     storage dtype of the fc1 output round-tripped through HBM on the
                 tiled path (bf16 halves that traffic; f32 for exact numerics).
    fused_max_b: largest B handled by the single-call fused (K-split) kernel.
    block_b:     batch-tile size for the tiled path (rounded to a multiple of 8).
    fc1_block_k: K-chunk for the fused path (must divide 1152; multiple of 128).
    """
    B = x.shape[0]
    assert x.shape[1] == IN_DIM
    # fc1 bias cancels exactly under training-mode BatchNorm (mean subtraction),
    # so it is never applied; this also makes zero-padded rows contribute exactly
    # 0 to the BN statistics on the tiled path.
    del b1

    w1c = jnp.asarray(w1).astype(fc1_dtype)        # ship fc1 weights narrow (once)
    gr = jnp.asarray(gamma, jnp.float32).reshape(1, HID)
    br = jnp.asarray(beta, jnp.float32).reshape(1, HID)
    w2c = jnp.asarray(w2, jnp.float32)
    b2r = jnp.asarray(b2, jnp.float32).reshape(1, OUT)

    # ---- small / medium batch: fused single call, K-split fc1 ----
    if B <= fused_max_b:
        if IN_DIM % fc1_block_k != 0 or fc1_block_k % 128 != 0:
            fc1_block_k = IN_DIM
        nk = IN_DIM // fc1_block_k
        return pl.pallas_call(
            _fused_kernel,
            grid=(nk,),
            in_specs=[
                pl.BlockSpec((B, fc1_block_k), lambda k: (0, k)),
                pl.BlockSpec((fc1_block_k, HID), lambda k: (k, 0)),
                pl.BlockSpec((1, HID), lambda k: (0, 0)),
                pl.BlockSpec((1, HID), lambda k: (0, 0)),
                pl.BlockSpec((HID, OUT), lambda k: (0, 0)),
                pl.BlockSpec((1, OUT), lambda k: (0, 0)),
            ],
            out_specs=pl.BlockSpec((B, OUT), lambda k: (0, 0)),
            out_shape=jax.ShapeDtypeStruct((B, OUT), jnp.float32),
            scratch_shapes=[pltpu.VMEM((B, HID), jnp.float32)],
            compiler_params=pltpu.CompilerParams(
                dimension_semantics=("arbitrary",),
                vmem_limit_bytes=_VMEM_LIMIT),
        )(x, w1c, gr, br, w2c, b2r)

    # ---- large batch: two-pass, batch-tiled, 'parallel' grid ----
    block_b = max(8, ((min(block_b, B) + 7) // 8) * 8)
    nt = -(-B // block_b)
    b_pad = nt * block_b
    if b_pad != B:
        # Padded rows have h == 0 (no fc1 bias), so they add exactly 0 to the BN
        # partial sums; we still divide by the true B below.
        x = jnp.pad(x, ((0, b_pad - B), (0, 0)))

    h, stats = pl.pallas_call(
        _fc1_stats_kernel,
        grid=(nt,),
        in_specs=[
            pl.BlockSpec((block_b, IN_DIM), lambda i: (i, 0)),
            pl.BlockSpec((IN_DIM, HID), lambda i: (0, 0)),
        ],
        out_specs=(
            pl.BlockSpec((block_b, HID), lambda i: (i, 0)),
            pl.BlockSpec((1, 2, HID), lambda i: (i, 0, 0)),
        ),
        out_shape=(
            jax.ShapeDtypeStruct((b_pad, HID), h_dtype),
            jax.ShapeDtypeStruct((nt, 2, HID), jnp.float32),
        ),
        compiler_params=pltpu.CompilerParams(
            dimension_semantics=("parallel",),
            vmem_limit_bytes=_VMEM_LIMIT),
    )(x, w1c)

    # Tiny (HID,)-sized reduction + fold of BN into scale/shift (plain JAX).
    sums = jnp.sum(stats[:, 0, :], axis=0)
    sumsq = jnp.sum(stats[:, 1, :], axis=0)
    mean = sums / B                                   # true batch size
    var = jnp.maximum(sumsq / B - mean * mean, 0.0)   # biased (training-mode) variance
    scale_v = gr.reshape(-1) * lax.rsqrt(var + BN_EPS)
    shift_v = br.reshape(-1) - mean * scale_v

    out = pl.pallas_call(
        _bn_act_fc2_kernel,
        grid=(nt,),
        in_specs=[
            pl.BlockSpec((block_b, HID), lambda i: (i, 0)),
            pl.BlockSpec((1, HID), lambda i: (0, 0)),
            pl.BlockSpec((1, HID), lambda i: (0, 0)),
            pl.BlockSpec((HID, OUT), lambda i: (0, 0)),
            pl.BlockSpec((1, OUT), lambda i: (0, 0)),
        ],
        out_specs=pl.BlockSpec((block_b, OUT), lambda i: (i, 0)),
        out_shape=jax.ShapeDtypeStruct((b_pad, OUT), jnp.float32),
        compiler_params=pltpu.CompilerParams(
            dimension_semantics=("parallel",),
            vmem_limit_bytes=_VMEM_LIMIT),
    )(h, scale_v.reshape(1, HID), shift_v.reshape(1, HID), w2c, b2r)
    return out[:B]


# --------------------------------------------------------------------------- #
# Pure-JAX reference (mirrors the PyTorch module, including the fc1 bias)
# --------------------------------------------------------------------------- #
def reference(x, w1, b1, gamma, beta, w2, b2, fc1_dtype=jnp.float32):
    h = jnp.dot(x.astype(fc1_dtype), jnp.asarray(w1).astype(fc1_dtype),
                preferred_element_type=jnp.float32) + b1.reshape(1, -1)
    mean = jnp.mean(h, axis=0, keepdims=True)
    var = jnp.mean((h - mean) ** 2, axis=0, keepdims=True)
    hn = (h - mean) * lax.rsqrt(var + BN_EPS) * gamma.reshape(1, -1) + beta.reshape(1, -1)
    sp = jnp.where(hn > SP_THRESH, hn, jnp.log1p(jnp.exp(jnp.minimum(hn, SP_THRESH))))
    z = sp @ w2 + b2.reshape(1, -1)
    return jax.nn.softmax(z, axis=-1)


if __name__ == "__main__":
    key = jax.random.PRNGKey(0)
    kx, k1, kb1, k2, kb2 = jax.random.split(key, 5)

    # PyTorch-ish uniform init; weights stored as (in, out).
    bound1 = 1.0 / (IN_DIM ** 0.5)
    w1 = jax.random.uniform(k1, (IN_DIM, HID), jnp.float32, -bound1, bound1)
    b1 = jax.random.uniform(kb1, (HID,), jnp.float32, -bound1, bound1)
    bound2 = 1.0 / (HID ** 0.5)
    w2 = jax.random.uniform(k2, (HID, OUT), jnp.float32, -bound2, bound2)
    b2 = jax.random.uniform(kb2, (OUT,), jnp.float32, -bound2, bound2)
    gamma = jnp.ones((HID,), jnp.float32)   # BatchNorm affine defaults
    beta = jnp.zeros((HID,), jnp.float32)

    # ---- small batch: fused K-split kernel ----
    B = 8
    x = jax.random.normal(kx, (B, IN_DIM), dtype=jnp.float32)
    ref_f32 = reference(x, w1, b1, gamma, beta, w2, b2)

    out_f32 = jax.block_until_ready(
        word_recognizer(x, w1, b1, gamma, beta, w2, b2,
                        fc1_dtype=jnp.float32, h_dtype=jnp.float32))
    assert out_f32.shape == (B, OUT)
    assert jnp.allclose(out_f32, ref_f32, atol=2e-5, rtol=1e-5), "fused f32 mismatch"
    assert jnp.allclose(jnp.sum(out_f32, axis=-1), 1.0, atol=1e-5)

    out_bf16 = jax.block_until_ready(word_recognizer(x, w1, b1, gamma, beta, w2, b2))
    assert jnp.allclose(out_bf16, ref_f32, atol=3e-2, rtol=3e-2), "fused bf16 drift too large"
    assert jnp.allclose(jnp.sum(out_bf16, axis=-1), 1.0, atol=1e-5)

    # ---- larger, non-multiple-of-block batch: tiled two-pass path (padding path) ----
    B2 = 200
    x2 = jax.random.normal(jax.random.PRNGKey(1), (B2, IN_DIM), dtype=jnp.float32)
    ref2 = reference(x2, w1, b1, gamma, beta, w2, b2)

    out_tiled_f32 = jax.block_until_ready(
        word_recognizer(x2, w1, b1, gamma, beta, w2, b2,
                        fc1_dtype=jnp.float32, h_dtype=jnp.float32,
                        fused_max_b=64, block_b=64))
    assert out_tiled_f32.shape == (B2, OUT)
    assert jnp.allclose(out_tiled_f32, ref2, atol=1e-4, rtol=1e-4), "tiled f32 mismatch"
    assert jnp.allclose(jnp.sum(out_tiled_f32, axis=-1), 1.0, atol=1e-5)

    out_tiled = jax.block_until_ready(
        word_recognizer(x2, w1, b1, gamma, beta, w2, b2,
                        fused_max_b=64, block_b=64))     # default bf16 fc1 + bf16 h
    assert jnp.allclose(out_tiled, ref2, atol=3e-2, rtol=3e-2), "tiled bf16 drift too large"
    assert jnp.allclose(jnp.sum(out_tiled, axis=-1), 1.0, atol=1e-5)

    print("KERNEL_OK")
</pallas_src>

<mosaic_0001>
module attributes {stable_mosaic.version = 11 : i64} {
  func.func @_fused_kernel(%arg0: i32, %arg1: memref<8x384xf32, #tpu.memory_space<vmem>>, %arg2: memref<384x256xf32, #tpu.memory_space<vmem>>, %arg3: memref<1x256xf32, #tpu.memory_space<vmem>>, %arg4: memref<1x256xf32, #tpu.memory_space<vmem>>, %arg5: memref<256x10xf32, #tpu.memory_space<vmem>>, %arg6: memref<1x10xf32, #tpu.memory_space<vmem>>, %arg7: memref<8x10xf32, #tpu.memory_space<vmem>>, %arg8: memref<8x256xf32, #tpu.memory_space<vmem>>) attributes {dimension_semantics = [#tpu.dimension_semantics<arbitrary>], iteration_bounds = array<i64: 3>, scalar_prefetch = 0 : i64, scratch_operands = 1 : i64, tpu.core_type = #tpu.core_type<tc>, window_params = [{transform_indices = @transform_0, window_bounds = array<i64: 8, 384>}, {transform_indices = @transform_1, window_bounds = array<i64: 384, 256>}, {pipeline_mode = #tpu.pipeline_mode<synchronous>, transform_indices = @transform_2, window_bounds = array<i64: 1, 256>}, {pipeline_mode = #tpu.pipeline_mode<synchronous>, transform_indices = @transform_3, window_bounds = array<i64: 1, 256>}, {pipeline_mode = #tpu.pipeline_mode<synchronous>, transform_indices = @transform_4, window_bounds = array<i64: 256, 10>}, {pipeline_mode = #tpu.pipeline_mode<synchronous>, transform_indices = @transform_5, window_bounds = array<i64: 1, 10>}, {pipeline_mode = #tpu.pipeline_mode<synchronous>, transform_indices = @transform_6, window_bounds = array<i64: 8, 10>}]} {
    %c0_i32 = arith.constant 0 : i32
    %0 = arith.cmpi eq, %arg0, %c0_i32 : i32
    %1 = arith.extui %0 : i1 to i32
    %c0_i32_0 = arith.constant 0 : i32
    %2 = arith.cmpi ne, %1, %c0_i32_0 : i32
    scf.if %2 {
      %cst_9 = arith.constant 0.000000e+00 : f32
      %12 = vector.broadcast %cst_9 : f32 to vector<8x256xf32>
      %c0_10 = arith.constant 0 : index
      %c0_11 = arith.constant 0 : index
      %13 = vector.load %arg8[%c0_10, %c0_11] : memref<8x256xf32, #tpu.memory_space<vmem>>, vector<8x256xf32>
      tpu.vector_store %arg8[%c0_10, %c0_11], %12 {strides = array<i32>} : memref<8x256xf32, #tpu.memory_space<vmem>>, vector<8x256xf32>,
    } else {
    }
    %c0 = arith.constant 0 : index
    %c0_1 = arith.constant 0 : index
    %3 = vector.load %arg8[%c0, %c0_1] : memref<8x256xf32, #tpu.memory_space<vmem>>, vector<8x256xf32>
    %c0_2 = arith.constant 0 : index
    %c0_3 = arith.constant 0 : index
    %4 = vector.load %arg1[%c0_2, %c0_3] : memref<8x384xf32, #tpu.memory_space<vmem>>, vector<8x384xf32>
    %c0_4 = arith.constant 0 : index
    %c0_5 = arith.constant 0 : index
    %5 = vector.load %arg2[%c0_4, %c0_5] : memref<384x256xf32, #tpu.memory_space<vmem>>, vector<384x256xf32>
    %cst = arith.constant dense<0.000000e+00> : vector<8x256xf32>
    %6 = tpu.matmul %4, %5, %cst {dimension_numbers = #tpu.dot_dimension_numbers<[1], [0], [0], [1], [0, 0, 1, 1], [], []>} : vector<8x384xf32>, vector<384x256xf32>, vector<8x256xf32> -> vector<8x256xf32>
    %7 = arith.addf %3, %6 : vector<8x256xf32>
    %c0_6 = arith.constant 0 : index
    %c0_7 = arith.constant 0 : index
    %8 = vector.load %arg8[%c0_6, %c0_7] : memref<8x256xf32, #tpu.memory_space<vmem>>, vector<8x256xf32>
    tpu.vector_store %arg8[%c0_6, %c0_7], %7 {strides = array<i32>} : memref<8x256xf32, #tpu.memory_space<vmem>>, vector<8x256xf32>,
    %c2_i32 = arith.constant 2 : i32
    %9 = arith.cmpi eq, %arg0, %c2_i32 : i32
    %10 = arith.extui %9 : i1 to i32
    %c0_i32_8 = arith.constant 0 : i32
    %11 = arith.cmpi ne, %10, %c0_i32_8 : i32
    scf.if %11 {
      %c0_9 = arith.constant 0 : index
      %c0_10 = arith.constant 0 : index
      %12 = vector.load %arg8[%c0_9, %c0_10] : memref<8x256xf32, #tpu.memory_space<vmem>>, vector<8x256xf32>
      %cst_11 = arith.constant dense<0.000000e+00> : vector<256xf32>
      %13 = vector.multi_reduction <add>, %12, %cst_11 [0] : vector<8x256xf32> to vector<256xf32>
      %14 = vector.shape_cast %13 : vector<256xf32> to vector<1x256xf32>
      %cst_12 = arith.constant 8.000000e+00 : f32
      %15 = vector.broadcast %cst_12 : f32 to vector<1x256xf32>
      %16 = arith.divf %14, %15 : vector<1x256xf32>
      %17 = vector.broadcast %16 : vector<1x256xf32> to vector<8x256xf32>
      %18 = arith.subf %12, %17 : vector<8x256xf32>
      %19 = arith.mulf %18, %18 : vector<8x256xf32>
      %cst_13 = arith.constant dense<0.000000e+00> : vector<256xf32>
      %20 = vector.multi_reduction <add>, %19, %cst_13 [0] : vector<8x256xf32> to vector<256xf32>
      %21 = vector.shape_cast %20 : vector<256xf32> to vector<1x256xf32>
      %cst_14 = arith.constant 8.000000e+00 : f32
      %22 = vector.broadcast %cst_14 : f32 to vector<1x256xf32>
      %23 = arith.divf %21, %22 : vector<1x256xf32>
      %c0_15 = arith.constant 0 : index
      %c0_16 = arith.constant 0 : index
      %24 = vector.load %arg3[%c0_15, %c0_16] : memref<1x256xf32, #tpu.memory_space<vmem>>, vector<1x256xf32>
      %cst_17 = arith.constant 9.99999974E-6 : f32
      %25 = vector.broadcast %cst_17 : f32 to vector<1x256xf32>
      %26 = arith.addf %23, %25 : vector<1x256xf32>
      %27 = math.rsqrt %26 : vector<1x256xf32>
      %28 = arith.mulf %24, %27 : vector<1x256xf32>
      %29 = vector.broadcast %28 : vector<1x256xf32> to vector<8x256xf32>
      %30 = arith.mulf %18, %29 : vector<8x256xf32>
      %c0_18 = arith.constant 0 : index
      %c0_19 = arith.constant 0 : index
      %31 = vector.load %arg4[%c0_18, %c0_19] : memref<1x256xf32, #tpu.memory_space<vmem>>, vector<1x256xf32>
      %32 = vector.broadcast %31 : vector<1x256xf32> to vector<8x256xf32>
      %33 = arith.addf %30, %32 : vector<8x256xf32>
      %cst_20 = arith.constant 2.000000e+01 : f32
      %34 = vector.broadcast %cst_20 : f32 to vector<8x256xf32>
      %35 = arith.cmpf ogt, %33, %34 : vector<8x256xf32>
      %cst_21 = arith.constant 2.000000e+01 : f32
      %36 = vector.broadcast %cst_21 : f32 to vector<8x256xf32>
      %37 = arith.minimumf %33, %36 : vector<8x256xf32>
      %38 = math.exp %37 : vector<8x256xf32>
      %39 = math.log1p %38 : vector<8x256xf32>
      %40 = arith.select %35, %33, %39 : vector<8x256xi1>, vector<8x256xf32>
      %c0_22 = arith.constant 0 : index
      %c0_23 = arith.constant 0 : index
      %41 = vector.load %arg5[%c0_22, %c0_23] : memref<256x10xf32, #tpu.memory_space<vmem>>, vector<256x10xf32>
      %cst_24 = arith.constant dense<0.000000e+00> : vector<8x10xf32>
      %42 = tpu.matmul %40, %41, %cst_24 {dimension_numbers = #tpu.dot_dimension_numbers<[1], [0], [0], [1], [0, 0, 1, 1], [], []>} : vector<8x256xf32>, vector<256x10xf32>, vector<8x10xf32> -> vector<8x10xf32>
      %c0_25 = arith.constant 0 : index
      %c0_26 = arith.constant 0 : index
      %43 = vector.load %arg6[%c0_25, %c0_26] : memref<1x10xf32, #tpu.memory_space<vmem>>, vector<1x10xf32>
      %44 = vector.broadcast %43 : vector<1x10xf32> to vector<8x10xf32>
      %45 = arith.addf %42, %44 : vector<8x10xf32>
      %cst_27 = arith.constant dense<0xFF800000> : vector<8xf32>
      %46 = vector.multi_reduction <maximumf>, %45, %cst_27 [1] : vector<8x10xf32> to vector<8xf32>
      %47 = vector.shape_cast %46 : vector<8xf32> to vector<8x1xf32>
      %48 = vector.broadcast %47 : vector<8x1xf32> to vector<8x10xf32>
      %49 = arith.subf %45, %48 : vector<8x10xf32>
      %50 = math.exp %49 : vector<8x10xf32>
      %cst_28 = arith.constant dense<0.000000e+00> : vector<8xf32>
      %51 = vector.multi_reduction <add>, %50, %cst_28 [1] : vector<8x10xf32> to vector<8xf32>
      %52 = vector.shape_cast %51 : vector<8xf32> to vector<8x1xf32>
      %53 = vector.broadcast %52 : vector<8x1xf32> to vector<8x10xf32>
      %54 = arith.divf %50, %53 : vector<8x10xf32>
      %c0_29 = arith.constant 0 : index
      %c0_30 = arith.constant 0 : index
      %55 = vector.load %arg7[%c0_29, %c0_30] : memref<8x10xf32, #tpu.memory_space<vmem>>, vector<8x10xf32>
      tpu.vector_store %arg7[%c0_29, %c0_30], %54 {strides = array<i32>} : memref<8x10xf32, #tpu.memory_space<vmem>>, vector<8x10xf32>,
    } else {
    }
    return
  }
  func.func @transform_0(%arg0: i32) -> (i32, i32) {
    %c0_i32 = arith.constant 0 : i32
    %c0_i32_0 = arith.constant 0 : i32
    return %c0_i32, %arg0 : i32, i32
  }
  func.func @transform_1(%arg0: i32) -> (i32, i32) {
    %c0_i32 = arith.constant 0 : i32
    %c0_i32_0 = arith.constant 0 : i32
    return %arg0, %c0_i32 : i32, i32
  }
  func.func @transform_2(%arg0: i32) -> (i32, i32) {
    %c0_i32 = arith.constant 0 : i32
    %c0_i32_0 = arith.constant 0 : i32
    %c0_i32_1 = arith.constant 0 : i32
    return %c0_i32, %c0_i32_0 : i32, i32
  }
  func.func @transform_3(%arg0: i32) -> (i32, i32) {
    %c0_i32 = arith.constant 0 : i32
    %c0_i32_0 = arith.constant 0 : i32
    %c0_i32_1 = arith.constant 0 : i32
    return %c0_i32, %c0_i32_0 : i32, i32
  }
  func.func @transform_4(%arg0: i32) -> (i32, i32) {
    %c0_i32 = arith.constant 0 : i32
    %c0_i32_0 = arith.constant 0 : i32
    %c0_i32_1 = arith.constant 0 : i32
    return %c0_i32, %c0_i32_0 : i32, i32
  }
  func.func @transform_5(%arg0: i32) -> (i32, i32) {
    %c0_i32 = arith.constant 0 : i32
    %c0_i32_0 = arith.constant 0 : i32
    %c0_i32_1 = arith.constant 0 : i32
    return %c0_i32, %c0_i32_0 : i32, i32
  }
  func.func @transform_6(%arg0: i32) -> (i32, i32) {
    %c0_i32 = arith.constant 0 : i32
    %c0_i32_0 = arith.constant 0 : i32
    %c0_i32_1 = arith.constant 0 : i32
    return %c0_i32, %c0_i32_0 : i32, i32
  }
}

</mosaic_0001>

<llo_original>
// kernel: tpu_custom_call.1
$region0: #{tpu_custom_call.1}
  #allocation0 [shape = 'u32[]', space=smem, size = 0x4, offset = 0x4, fixed_abs, tag = 'smem constant byte address 0x4 - core index']
  #allocation1 [shape = 'u32[144,128]{1,0:T(1,128)}', space=vmem, size = 0x12000, scoped, tag = 'internal scratch']
  #allocation2 [shape = 'f32[8,256]{1,0:T(8,128)}', space=vmem, size = 0x2000, scoped, tag = 'scratch operand']
  %s0 = inlined_call_operand.hbm [shape: f32[8,1152], index: 0, kind: input, shape index: {}]
  %s1 = inlined_call_operand.hbm [shape: f32[1152,256], index: 1, kind: input, shape index: {}]
  %s2 = inlined_call_operand.hbm [shape: f32[1,256], index: 2, kind: input, shape index: {}]
  %s3 = inlined_call_operand.hbm [shape: f32[1,256], index: 3, kind: input, shape index: {}]
  %s4 = inlined_call_operand.vmem [shape: f32[256,10], index: 4, kind: input, shape index: {}]
  %s5 = inlined_call_operand.hbm [shape: f32[1,10], index: 5, kind: input, shape index: {}]
  %s6 = inlined_call_operand.hbm [shape: f32[8,10], index: 6, kind: output, shape index: {}]
  %s7 = sld [smem:[#allocation0]]
  $region85: #{tpu_custom_call.1} parent=0
    _
  %s9 = ssub.s32 1, %s7
  %s10 = scalar_select 0, %s9, %s7
  $region1: #{tpu_custom_call.1} parent=0
    #allocation3 [shape = 'u8[24576]{0}', space=vmem, size = 0x6000, scoped, tag = 'input window, operand 0']
    #allocation4 [shape = 's32[2]{0}', space=sflag, size = 0x8, scoped, tag = 'scoped memory for tpu_custom_call.1']
    #allocation5 [shape = 's32[2]{0}', space=sflag, size = 0x8, scoped, tag = 'scoped memory for tpu_custom_call.1']
    #allocation6 [shape = 'u8[786432]{0}', space=vmem, size = 0xc0000, scoped, tag = 'input window, operand 1']
    #allocation7 [shape = 's32[2]{0}', space=sflag, size = 0x8, scoped, tag = 'scoped memory for tpu_custom_call.1']
    #allocation8 [shape = 'u8[1024]{0}', space=vmem, size = 0x400, scoped, tag = 'input window, operand 2, single buffered']
    #allocation9 [shape = 'u8[1024]{0}', space=vmem, size = 0x400, scoped, tag = 'input window, operand 3, single buffered']
    #allocation10 [shape = 's32[1]{0}', space=sflag, size = 0x4, scoped, tag = 'scoped memory for tpu_custom_call.1']
    #allocation11 [shape = 'u8[512]{0}', space=vmem, size = 0x400, scoped, tag = 'input window, operand 5, single buffered']
    #allocation12 [shape = 'u8[4096]{0}', space=vmem, size = 0x1000, scoped, tag = 'output window, operand 0, single buffered']
    %11 = vsyncpa [#allocation4], 0
    %s12 = scalar_lea.sflag [#allocation4], 1
    %13 = vsyncpa %s12, 0
    %14 = vsyncpa [#allocation7], 0
    %s15 = scalar_lea.sflag [#allocation7], 1
    %16 = vsyncpa %s15, 0
    %17 = vsyncpa [#allocation10], 0
    %18 = vsyncpa [#allocation5], 0
    loop: start=0, step=1, limit=5
    $region2: #{tpu_custom_call.1} parent=1 // loop_pre_header
      _
    $region3: #{tpu_custom_call.1} parent=1 // loop_header
      %s20 = sphi 0, %s24
      %p21 = scmp.ge.s32.totalorder %s20, 5
      %s30 = sphi 0, %s32
      %s33 = sphi 0, %s30
      %s34 = sphi 0, %s33
      %s50 = sphi 0, %s34
      %s56 = sphi 0, %s58
      %s59 = sphi 0, %s56
      %s60 = sphi 0, %s59
      %s76 = sphi 0, %s60
      %s80 = sphi 0, %s80
      %s82 = sphi 0, %s80
      %s83 = sphi 0, %s82
      %s97 = sphi 0, %s83
      %s101 = sphi 0, %s101
      %s103 = sphi 0, %s101
      %s104 = sphi 0, %s103
      %s118 = sphi 0, %s104
      %s122 = sphi 0, %s122
      %s124 = sphi 0, %s122
      %s125 = sphi 0, %s124
      %s139 = sphi 0, %s125
      %s143 = sphi 0, %s143
      %s145 = sphi 0, %s143
      %s146 = sphi 0, %s145
      %s160 = sphi 0, %s146
      %s164 = sphi 0, %s164
      %s166 = sphi 0, %s164
      %s167 = sphi 0, %s166
      %s181 = sphi 0, %s167
    $region4: #{tpu_custom_call.1} parent=1 // loop_header_branch
      %23 = sbr.rel (%p21) target = $region8
    $region5: #{tpu_custom_call.1} parent=1 // loop_body
      %s25 = ssub.s32 %s20, 1
      %s26 = ssub.s32 %s20, 2
      %s27 = sadd.s32 %s20, 1
      %s28 = ssub.s32 %s20, %s27
      %p29 = scmp.eq.s32.totalorder %s28, 0
      %s31 = sadd.s32 %s30, 1
      %s32 = scalar_select %p29, %s30, %s31
      %p35 = pneg %p29
      %p36 = scmp.eq.s32.totalorder %s20, 2
      %p37 = por %p35, %p36
      %p38 = scmp.ne.s32.totalorder %s30, %s33
      %p39 = scmp.eq.s32.totalorder %s20, 0
      %p40 = por %p38, %p39
      %p41 = scmp.ne.s32.totalorder %s30, %s33
      %p42 = scmp.eq.s32.totalorder %s25, 2
      %p43 = por %p41, %p42
      %p44 = scmp.ne.s32.totalorder %s33, %s34
      %p45 = scmp.eq.s32.totalorder %s25, 0
      %p46 = por %p44, %p45
      %p47 = scmp.ne.s32.totalorder %s33, %s34
      %p48 = scmp.eq.s32.totalorder %s26, 2
      %p49 = por %p47, %p48
      %p51 = scmp.ne.s32.totalorder %s34, %s50
      %p52 = scmp.eq.s32.totalorder %s26, 0
      %p53 = por %p51, %p52
      %s54 = ssub.s32 %s20, %s27
      %p55 = scmp.eq.s32.totalorder %s54, 0
      %s57 = sadd.s32 %s56, 1
      %s58 = scalar_select %p55, %s56, %s57
      %p61 = pneg %p55
      %p62 = scmp.eq.s32.totalorder %s20, 2
      %p63 = por %p61, %p62
      %p64 = scmp.ne.s32.totalorder %s56, %s59
      %p65 = scmp.eq.s32.totalorder %s20, 0
      %p66 = por %p64, %p65
      %p67 = scmp.ne.s32.totalorder %s56, %s59
      %p68 = scmp.eq.s32.totalorder %s25, 2
      %p69 = por %p67, %p68
      %p70 = scmp.ne.s32.totalorder %s59, %s60
      %p71 = scmp.eq.s32.totalorder %s25, 0
      %p72 = por %p70, %p71
      %p73 = scmp.ne.s32.totalorder %s59, %s60
      %p74 = scmp.eq.s32.totalorder %s26, 2
      %p75 = por %p73, %p74
      %p77 = scmp.ne.s32.totalorder %s60, %s76
      %p78 = scmp.eq.s32.totalorder %s26, 0
      %p79 = por %p77, %p78
      %s81 = sadd.s32 %s80, 1
      %p84 = scmp.eq.s32.totalorder %s20, 2
      %p85 = scmp.ne.s32.totalorder %s80, %s82
      %p86 = scmp.eq.s32.totalorder %s20, 0
      %p87 = por %p85, %p86
      %p88 = scmp.ne.s32.totalorder %s80, %s82
      %p89 = scmp.eq.s32.totalorder %s25, 2
      %p90 = por %p88, %p89
      %p91 = scmp.ne.s32.totalorder %s82, %s83
      %p92 = scmp.eq.s32.totalorder %s25, 0
      %p93 = por %p91, %p92
      %p94 = scmp.ne.s32.totalorder %s82, %s83
      %p95 = scmp.eq.s32.totalorder %s26, 2
      %p96 = por %p94, %p95
      %p98 = scmp.ne.s32.totalorder %s83, %s97
      %p99 = scmp.eq.s32.totalorder %s26, 0
      %p100 = por %p98, %p99
      %s102 = sadd.s32 %s101, 1
      %p105 = scmp.eq.s32.totalorder %s20, 2
      %p106 = scmp.ne.s32.totalorder %s101, %s103
      %p107 = scmp.eq.s32.totalorder %s20, 0
      %p108 = por %p106, %p107
      %p109 = scmp.ne.s32.totalorder %s101, %s103
      %p110 = scmp.eq.s32.totalorder %s25, 2
      %p111 = por %p109, %p110
      %p112 = scmp.ne.s32.totalorder %s103, %s104
      %p113 = scmp.eq.s32.totalorder %s25, 0
      %p114 = por %p112, %p113
      %p115 = scmp.ne.s32.totalorder %s103, %s104
      %p116 = scmp.eq.s32.totalorder %s26, 2
      %p117 = por %p115, %p116
      %p119 = scmp.ne.s32.totalorder %s104, %s118
      %p120 = scmp.eq.s32.totalorder %s26, 0
      %p121 = por %p119, %p120
      %s123 = sadd.s32 %s122, 1
      %p126 = scmp.eq.s32.totalorder %s20, 2
      %p127 = scmp.ne.s32.totalorder %s122, %s124
      %p128 = scmp.eq.s32.totalorder %s20, 0
      %p129 = por %p127, %p128
      %p130 = scmp.ne.s32.totalorder %s122, %s124
      %p131 = scmp.eq.s32.totalorder %s25, 2
      %p132 = por %p130, %p131
      %p133 = scmp.ne.s32.totalorder %s124, %s125
      %p134 = scmp.eq.s32.totalorder %s25, 0
      %p135 = por %p133, %p134
      %p136 = scmp.ne.s32.totalorder %s124, %s125
      %p137 = scmp.eq.s32.totalorder %s26, 2
      %p138 = por %p136, %p137
      %p140 = scmp.ne.s32.totalorder %s125, %s139
      %p141 = scmp.eq.s32.totalorder %s26, 0
      %p142 = por %p140, %p141
      %s144 = sadd.s32 %s143, 1
      %p147 = scmp.eq.s32.totalorder %s20, 2
      %p148 = scmp.ne.s32.totalorder %s143, %s145
      %p149 = scmp.eq.s32.totalorder %s20, 0
      %p150 = por %p148, %p149
      %p151 = scmp.ne.s32.totalorder %s143, %s145
      %p152 = scmp.eq.s32.totalorder %s25, 2
      %p153 = por %p151, %p152
      %p154 = scmp.ne.s32.totalorder %s145, %s146
      %p155 = scmp.eq.s32.totalorder %s25, 0
      %p156 = por %p154, %p155
      %p157 = scmp.ne.s32.totalorder %s145, %s146
      %p158 = scmp.eq.s32.totalorder %s26, 2
      %p159 = por %p157, %p158
      %p161 = scmp.ne.s32.totalorder %s146, %s160
      %p162 = scmp.eq.s32.totalorder %s26, 0
      %p163 = por %p161, %p162
      %s165 = sadd.s32 %s164, 1
      %p168 = scmp.eq.s32.totalorder %s20, 2
      %p169 = scmp.ne.s32.totalorder %s164, %s166
      %p170 = scmp.eq.s32.totalorder %s20, 0
      %p171 = por %p169, %p170
      %p172 = scmp.ne.s32.totalorder %s164, %s166
      %p173 = scmp.eq.s32.totalorder %s25, 2
      %p174 = por %p172, %p173
      %p175 = scmp.ne.s32.totalorder %s166, %s167
      %p176 = scmp.eq.s32.totalorder %s25, 0
      %p177 = por %p175, %p176
      %p178 = scmp.ne.s32.totalorder %s166, %s167
      %p179 = scmp.eq.s32.totalorder %s26, 2
      %p180 = por %p178, %p179
      %p182 = scmp.ne.s32.totalorder %s167, %s181
      %p183 = scmp.eq.s32.totalorder %s26, 0
      %p184 = por %p182, %p183
      %p185 = scmp.le.s32.totalorder 1, %s20
      %p186 = scmp.lt.s32.totalorder %s20, 4
      %p187 = pnand %p185, %p186
      %p188 = pneg %p187
      // Predicated region
      $region9: #{tpu_custom_call.1} parent=5 // pred_check
        _
      $region10: #{tpu_custom_call.1} parent=5 // pred_check_branch
        %190 = sbr.rel (%p187) target = $region12
      $region11: #{tpu_custom_call.1} parent=5 // pred_region
        %s191 = ssub.s32 %s20, 1
        // Predicated region
        $region13: #{tpu_custom_call.1} parent=11 // pred_check
          %p192 = pneg %p93
        $region14: #{tpu_custom_call.1} parent=11 // pred_check_branch
          %194 = sbr.rel (%p192) target = $region16
        $region15: #{tpu_custom_call.1} parent=11 // pred_region
          %s196 = ssub.s32 32, 32
          %197 = vsyncadd [#allocation7], %s196
          %s199 = sshll.u32 [#allocation8], 4
          %s200 = int_to_ptr.vmem [resolvable:$true] %s199
          %202 = dma.hbm_to_vmem [thread:$0]  %s2, 32, %s200, [#allocation7]
        $region16: #{tpu_custom_call.1} parent=11 // pred_fallthru
          _
        // Predicated region
        $region17: #{tpu_custom_call.1} parent=11 // pred_check
          %p203 = pneg %p114
        $region18: #{tpu_custom_call.1} parent=11 // pred_check_branch
          %205 = sbr.rel (%p203) target = $region20
        $region19: #{tpu_custom_call.1} parent=11 // pred_region
          %s207 = ssub.s32 32, 32
          %208 = vsyncadd [#allocation10], %s207
          %s210 = sshll.u32 [#allocation9], 4
          %s211 = int_to_ptr.vmem [resolvable:$true] %s210
          %213 = dma.hbm_to_vmem [thread:$0]  %s3, 32, %s211, [#allocation10]
        $region20: #{tpu_custom_call.1} parent=11 // pred_fallthru
          _
        // Predicated region
        $region21: #{tpu_custom_call.1} parent=11 // pred_check
          %p214 = pneg %p135
        $region22: #{tpu_custom_call.1} parent=11 // pred_check_branch
          %216 = sbr.rel (%p214) target = $region24
        $region23: #{tpu_custom_call.1} parent=11 // pred_region
          _
        $region24: #{tpu_custom_call.1} parent=11 // pred_fallthru
          _
        // Predicated region
        $region25: #{tpu_custom_call.1} parent=11 // pred_check
          %p217 = pneg %p156
        $region26: #{tpu_custom_call.1} parent=11 // pred_check_branch
          %219 = sbr.rel (%p217) target = $region28
        $region27: #{tpu_custom_call.1} parent=11 // pred_region
          %s221 = ssub.s32 16, 16
          %222 = vsyncadd [#allocation10], %s221
          %s224 = sshll.u32 [#allocation11], 4
          %s225 = int_to_ptr.vmem [resolvable:$true] %s224
          %227 = dma.hbm_to_vmem [thread:$0]  %s5, 16, %s225, [#allocation10]
        $region28: #{tpu_custom_call.1} parent=11 // pred_fallthru
          _
      $region12: #{tpu_custom_call.1} parent=5 // pred_fallthru
        _
      %p228 = scmp.lt.s32.totalorder %s20, 3
      // Predicated region
      $region29: #{tpu_custom_call.1} parent=5 // pred_check
        %p229 = pneg %p228
      $region30: #{tpu_custom_call.1} parent=5 // pred_check_branch
        %231 = sbr.rel (%p229) target = $region32
      $region31: #{tpu_custom_call.1} parent=5 // pred_region
        // Predicated region
        $region33: #{tpu_custom_call.1} parent=31 // pred_check
          %p232 = pneg %p40
        $region34: #{tpu_custom_call.1} parent=31 // pred_check_branch
          %234 = sbr.rel (%p232) target = $region36
        $region35: #{tpu_custom_call.1} parent=31 // pred_region
          %s235 = sand.u32 %s30, 1
          %s236 = scalar_lea.sflag [#allocation4], %s235
          %s237 = sand.u32 %s30, 1
          %s238 = smul.addr %s237, 24
          %s239 = scalar_lea.vmem [#allocation3], %s238
          %s240 = smul.u32 3, %s20
          %s242 = ssub.s32 384, 384
          %243 = vsyncadd %s236, %s242
          %s244 = smul.addr %s240, 128
          %s245 = scalar_lea.hbm %s0, %s244
          %s247 = sshll.u32 %s239, 4
          %s248 = int_to_ptr.vmem [resolvable:$true] %s247
          %250 = dma.hbm_to_vmem [thread:$0]  %s245, 384, %s248, %s236
        $region36: #{tpu_custom_call.1} parent=31 // pred_fallthru
          _
        // Predicated region
        $region37: #{tpu_custom_call.1} parent=31 // pred_check
          %p251 = pneg %p66
        $region38: #{tpu_custom_call.1} parent=31 // pred_check_branch
          %253 = sbr.rel (%p251) target = $region40
        $region39: #{tpu_custom_call.1} parent=31 // pred_region
          %s254 = sand.u32 %s20, 1
          %s255 = scalar_lea.sflag [#allocation7], %s254
          %s256 = sand.u32 %s56, 1
          %s257 = smul.addr %s256, 768
          %s258 = scalar_lea.vmem [#allocation6], %s257
          %s259 = smul.u32 48, %s20
          %s261 = ssub.s32 12288, 12288
          %262 = vsyncadd %s255, %s261
          %s263 = smul.addr %s259, 2
          %s264 = smul.addr %s263, 128
          %s265 = scalar_lea.hbm %s1, %s264
          %s266 = sshll.u32 %s258, 4
          %s267 = int_to_ptr.vmem [resolvable:$true] %s266
          %272 = dma.hbm_to_vmem [thread:$0]  %s265, 12288, %s267, %s255, 256, 256, 16
        $region40: #{tpu_custom_call.1} parent=31 // pred_fallthru
          _
      $region32: #{tpu_custom_call.1} parent=5 // pred_fallthru
        _
      %p273 = scmp.le.s32.totalorder 1, %s20
      %p274 = scmp.lt.s32.totalorder %s20, 4
      %p275 = pnand %p273, %p274
      %p276 = pneg %p275
      // Predicated region
      $region41: #{tpu_custom_call.1} parent=5 // pred_check
        _
      $region42: #{tpu_custom_call.1} parent=5 // pred_check_branch
        %278 = sbr.rel (%p275) target = $region44
      $region43: #{tpu_custom_call.1} parent=5 // pred_region
        %s279 = ssub.s32 %s20, 1
        %s280 = sand.u32 %s33, 1
        %s281 = scalar_lea.sflag [#allocation4], %s280
        %s282 = sand.u32 %s33, 1
        %s283 = smul.addr %s282, 24
        %s284 = scalar_lea.vmem [#allocation3], %s283
        // Predicated region
        $region45: #{tpu_custom_call.1} parent=43 // pred_check
          %p285 = pneg %p46
        $region46: #{tpu_custom_call.1} parent=43 // pred_check_branch
          %287 = sbr.rel (%p285) target = $region48
        $region47: #{tpu_custom_call.1} parent=43 // pred_region
          %288 = dma.done %s281, 384
        $region48: #{tpu_custom_call.1} parent=43 // pred_fallthru
          _
        %s289 = sand.u32 %s25, 1
        %s290 = scalar_lea.sflag [#allocation7], %s289
        %s291 = sand.u32 %s59, 1
        %s292 = smul.addr %s291, 768
        %s293 = scalar_lea.vmem [#allocation6], %s292
        // Predicated region
        $region49: #{tpu_custom_call.1} parent=43 // pred_check
          %p294 = pneg %p72
        $region50: #{tpu_custom_call.1} parent=43 // pred_check_branch
          %296 = sbr.rel (%p294) target = $region52
        $region51: #{tpu_custom_call.1} parent=43 // pred_region
          %297 = dma.done %s290, 12288
        $region52: #{tpu_custom_call.1} parent=43 // pred_fallthru
          _
        // Predicated region
        $region53: #{tpu_custom_call.1} parent=43 // pred_check
          %p298 = pneg %p93
        $region54: #{tpu_custom_call.1} parent=43 // pred_check_branch
          %300 = sbr.rel (%p298) target = $region56
        $region55: #{tpu_custom_call.1} parent=43 // pred_region
          %301 = dma.done [#allocation7], 32
        $region56: #{tpu_custom_call.1} parent=43 // pred_fallthru
          _
        // Predicated region
        $region57: #{tpu_custom_call.1} parent=43 // pred_check
          %p302 = pneg %p114
        $region58: #{tpu_custom_call.1} parent=43 // pred_check_branch
          %304 = sbr.rel (%p302) target = $region60
        $region59: #{tpu_custom_call.1} parent=43 // pred_region
          %305 = dma.done [#allocation10], 32
        $region60: #{tpu_custom_call.1} parent=43 // pred_fallthru
          _
        // Predicated region
        $region61: #{tpu_custom_call.1} parent=43 // pred_check
          %p306 = pneg %p156
        $region62: #{tpu_custom_call.1} parent=43 // pred_check_branch
          %308 = sbr.rel (%p306) target = $region64
        $region63: #{tpu_custom_call.1} parent=43 // pred_region
          %309 = dma.done [#allocation10], 16
        $region64: #{tpu_custom_call.1} parent=43 // pred_fallthru
          _
        %s310 = sand.u32 %s33, 1
        %s311 = scalar_lea.sflag [#allocation4], %s310
        %s312 = sand.u32 %s33, 1
        %s313 = smul.addr %s312, 24
        %s314 = scalar_lea.vmem [#allocation3], %s313
        %p315 = pneg %p46
        %p316 = pneg %p43
        %s317 = sand.u32 %s25, 1
        %s318 = scalar_lea.sflag [#allocation7], %s317
        %s319 = sand.u32 %s59, 1
        %s320 = smul.addr %s319, 768
        %s321 = scalar_lea.vmem [#allocation6], %s320
        %p322 = pneg %p72
        %p323 = pneg %p69
        %p324 = pneg %p93
        %p325 = pneg %p90
        %p326 = pneg %p114
        %p327 = pneg %p111
        %p328 = pneg %p135
        %p329 = pneg %p132
        %p330 = pneg %p156
        %p331 = pneg %p153
        %p332 = pneg %p177
        %p333 = pneg %p174
        %s334 = smul.u32 3, %s25
        %s335 = smul.u32 48, %s25
        %p336 = scmp.eq.s32.totalorder %s25, 0
        // Predicated region
        $region65: #{tpu_custom_call.1} parent=43 // pred_check
          %p337 = pneg %p336
        $region66: #{tpu_custom_call.1} parent=43 // pred_check_branch
          %339 = sbr.rel (%p337) target = $region68
        $region67: #{tpu_custom_call.1} parent=43 // pred_region
          %340 = vst [vmem:[#allocation2] sm:$0xff] 0.0
          %341 = vst [vmem:[#allocation2 + $0x8] sm:$0xff] 0.0
        $region68: #{tpu_custom_call.1} parent=43 // pred_fallthru
          _
        %v342 = vld [vmem:[#allocation2] sm:$0xff]
        %v343 = vld [vmem:[#allocation2 + $0x8] sm:$0xff]
        %v344 = vld [vmem:[%s284] sm:$0xff]
        %v345 = vld [vmem:[%s284 + $0x8] sm:$0xff]
        %v346 = vld [vmem:[%s284 + $0x10] sm:$0xff]
        %v347 = vld [vmem:[%s293] sm:$0xff]
        %v348 = vld [vmem:[%s293 + $0x8] sm:$0xff]
        %v349 = vld [vmem:[%s293 + $0x10] sm:$0xff]
        %v350 = vld [vmem:[%s293 + $0x18] sm:$0xff]
        %v351 = vld [vmem:[%s293 + $0x20] sm:$0xff]
        %v352 = vld [vmem:[%s293 + $0x28] sm:$0xff]
        %v353 = vld [vmem:[%s293 + $0x30] sm:$0xff]
        %v354 = vld [vmem:[%s293 + $0x38] sm:$0xff]
        %v355 = vld [vmem:[%s293 + $0x40] sm:$0xff]
        %v356 = vld [vmem:[%s293 + $0x48] sm:$0xff]
        %v357 = vld [vmem:[%s293 + $0x50] sm:$0xff]
        %v358 = vld [vmem:[%s293 + $0x58] sm:$0xff]
        %v359 = vld [vmem:[%s293 + $0x60] sm:$0xff]
        %v360 = vld [vmem:[%s293 + $0x68] sm:$0xff]
        %v361 = vld [vmem:[%s293 + $0x70] sm:$0xff]
        %v362 = vld [vmem:[%s293 + $0x78] sm:$0xff]
        %v363 = vld [vmem:[%s293 + $0x80] sm:$0xff]
        %v364 = vld [vmem:[%s293 + $0x88] sm:$0xff]
        %v365 = vld [vmem:[%s293 + $0x90] sm:$0xff]
        %v366 = vld [vmem:[%s293 + $0x98] sm:$0xff]
        %v367 = vld [vmem:[%s293 + $0xa0] sm:$0xff]
        %v368 = vld [vmem:[%s293 + $0xa8] sm:$0xff]
        %v369 = vld [vmem:[%s293 + $0xb0] sm:$0xff]
        %v370 = vld [vmem:[%s293 + $0xb8] sm:$0xff]
        %v371 = vld [vmem:[%s293 + $0xc0] sm:$0xff]
        %v372 = vld [vmem:[%s293 + $0xc8] sm:$0xff]
        %v373 = vld [vmem:[%s293 + $0xd0] sm:$0xff]
        %v374 = vld [vmem:[%s293 + $0xd8] sm:$0xff]
        %v375 = vld [vmem:[%s293 + $0xe0] sm:$0xff]
        %v376 = vld [vmem:[%s293 + $0xe8] sm:$0xff]
        %v377 = vld [vmem:[%s293 + $0xf0] sm:$0xff]
        %v378 = vld [vmem:[%s293 + $0xf8] sm:$0xff]
        %v379 = vld [vmem:[%s293 + $0x100] sm:$0xff]
        %v380 = vld [vmem:[%s293 + $0x108] sm:$0xff]
        %v381 = vld [vmem:[%s293 + $0x110] sm:$0xff]
        %v382 = vld [vmem:[%s293 + $0x118] sm:$0xff]
        %v383 = vld [vmem:[%s293 + $0x120] sm:$0xff]
        %v384 = vld [vmem:[%s293 + $0x128] sm:$0xff]
        %v385 = vld [vmem:[%s293 + $0x130] sm:$0xff]
        %v386 = vld [vmem:[%s293 + $0x138] sm:$0xff]
        %v387 = vld [vmem:[%s293 + $0x140] sm:$0xff]
        %v388 = vld [vmem:[%s293 + $0x148] sm:$0xff]
        %v389 = vld [vmem:[%s293 + $0x150] sm:$0xff]
        %v390 = vld [vmem:[%s293 + $0x158] sm:$0xff]
        %v391 = vld [vmem:[%s293 + $0x160] sm:$0xff]
        %v392 = vld [vmem:[%s293 + $0x168] sm:$0xff]
        %v393 = vld [vmem:[%s293 + $0x170] sm:$0xff]
        %v394 = vld [vmem:[%s293 + $0x178] sm:$0xff]
        %v395 = vld [vmem:[%s293 + $0x180] sm:$0xff]
        %v396 = vld [vmem:[%s293 + $0x188] sm:$0xff]
        %v397 = vld [vmem:[%s293 + $0x190] sm:$0xff]
        %v398 = vld [vmem:[%s293 + $0x198] sm:$0xff]
        %v399 = vld [vmem:[%s293 + $0x1a0] sm:$0xff]
        %v400 = vld [vmem:[%s293 + $0x1a8] sm:$0xff]
        %v401 = vld [vmem:[%s293 + $0x1b0] sm:$0xff]
        %v402 = vld [vmem:[%s293 + $0x1b8] sm:$0xff]
        %v403 = vld [vmem:[%s293 + $0x1c0] sm:$0xff]
        %v404 = vld [vmem:[%s293 + $0x1c8] sm:$0xff]
        %v405 = vld [vmem:[%s293 + $0x1d0] sm:$0xff]
        %v406 = vld [vmem:[%s293 + $0x1d8] sm:$0xff]
        %v407 = vld [vmem:[%s293 + $0x1e0] sm:$0xff]
        %v408 = vld [vmem:[%s293 + $0x1e8] sm:$0xff]
        %v409 = vld [vmem:[%s293 + $0x1f0] sm:$0xff]
        %v410 = vld [vmem:[%s293 + $0x1f8] sm:$0xff]
        %v411 = vld [vmem:[%s293 + $0x200] sm:$0xff]
        %v412 = vld [vmem:[%s293 + $0x208] sm:$0xff]
        %v413 = vld [vmem:[%s293 + $0x210] sm:$0xff]
        %v414 = vld [vmem:[%s293 + $0x218] sm:$0xff]
        %v415 = vld [vmem:[%s293 + $0x220] sm:$0xff]
        %v416 = vld [vmem:[%s293 + $0x228] sm:$0xff]
        %v417 = vld [vmem:[%s293 + $0x230] sm:$0xff]
        %v418 = vld [vmem:[%s293 + $0x238] sm:$0xff]
        %v419 = vld [vmem:[%s293 + $0x240] sm:$0xff]
        %v420 = vld [vmem:[%s293 + $0x248] sm:$0xff]
        %v421 = vld [vmem:[%s293 + $0x250] sm:$0xff]
        %v422 = vld [vmem:[%s293 + $0x258] sm:$0xff]
        %v423 = vld [vmem:[%s293 + $0x260] sm:$0xff]
        %v424 = vld [vmem:[%s293 + $0x268] sm:$0xff]
        %v425 = vld [vmem:[%s293 + $0x270] sm:$0xff]
        %v426 = vld [vmem:[%s293 + $0x278] sm:$0xff]
        %v427 = vld [vmem:[%s293 + $0x280] sm:$0xff]
        %v428 = vld [vmem:[%s293 + $0x288] sm:$0xff]
        %v429 = vld [vmem:[%s293 + $0x290] sm:$0xff]
        %v430 = vld [vmem:[%s293 + $0x298] sm:$0xff]
        %v431 = vld [vmem:[%s293 + $0x2a0] sm:$0xff]
        %v432 = vld [vmem:[%s293 + $0x2a8] sm:$0xff]
        %v433 = vld [vmem:[%s293 + $0x2b0] sm:$0xff]
        %v434 = vld [vmem:[%s293 + $0x2b8] sm:$0xff]
        %v435 = vld [vmem:[%s293 + $0x2c0] sm:$0xff]
        %v436 = vld [vmem:[%s293 + $0x2c8] sm:$0xff]
        %v437 = vld [vmem:[%s293 + $0x2d0] sm:$0xff]
        %v438 = vld [vmem:[%s293 + $0x2d8] sm:$0xff]
        %v439 = vld [vmem:[%s293 + $0x2e0] sm:$0xff]
        %v440 = vld [vmem:[%s293 + $0x2e8] sm:$0xff]
        %v441 = vld [vmem:[%s293 + $0x2f0] sm:$0xff]
        %v442 = vld [vmem:[%s293 + $0x2f8] sm:$0xff]
        %443 = vmatprep.subr.mxu0 %v378
        %444 = vmatpush1.msra.mxu0 %v377
        %445 = vmatprep.subr.mxu0 %v376
        %446 = vmatpush1.msra.mxu0 %v375
        %447 = vmatprep.subr.mxu0 %v374
        %448 = vmatpush1.msra.mxu0 %v373
        %449 = vmatprep.subr.mxu0 %v372
        %450 = vmatpush1.msra.mxu0 %v371
        %451 = vmatprep.subr.mxu0 %v370
        %452 = vmatpush1.msra.mxu0 %v369
        %453 = vmatprep.subr.mxu0 %v368
        %454 = vmatpush1.msra.mxu0 %v367
        %455 = vmatprep.subr.mxu0 %v366
        %456 = vmatpush1.msra.mxu0 %v365
        %457 = vmatprep.subr.mxu0 %v364
        %458 = vmatpush1.msra.mxu0 %v363
        %459 = vmatprep.subr.mxu0 %v362
        %460 = vmatpush1.msra.mxu0 %v361
        %461 = vmatprep.subr.mxu0 %v360
        %462 = vmatpush1.msra.mxu0 %v359
        %463 = vmatprep.subr.mxu0 %v358
        %464 = vmatpush1.msra.mxu0 %v357
        %465 = vmatprep.subr.mxu0 %v356
        %466 = vmatpush1.msra.mxu0 %v355
        %467 = vmatprep.subr.mxu0 %v354
        %468 = vmatpush1.msra.mxu0 %v353
        %469 = vmatprep.subr.mxu0 %v352
        %470 = vmatpush1.msra.mxu0 %v351
        %471 = vmatprep.subr.mxu0 %v350
        %472 = vmatpush1.msra.mxu0 %v349
        %473 = vmatprep.subr.mxu0 %v348
        %474 = vmatpush1.msra.mxu0 %v347
        %475 = vmatprep.subr.mxu0 %v410
        %476 = vmatpush2.msra.mxu0 %v409
        %477 = vmatprep.subr.mxu0 %v408
        %478 = vmatpush2.msra.mxu0 %v407
        %479 = vmatprep.subr.mxu0 %v406
        %480 = vmatpush2.msra.mxu0 %v405
        %481 = vmatprep.subr.mxu0 %v404
        %482 = vmatpush2.msra.mxu0 %v403
        %483 = vmatprep.subr.mxu0 %v402
        %484 = vmatpush2.msra.mxu0 %v401
        %485 = vmatprep.subr.mxu0 %v400
        %486 = vmatpush2.msra.mxu0 %v399
        %487 = vmatprep.subr.mxu0 %v398
        %488 = vmatpush2.msra.mxu0 %v397
        %489 = vmatprep.subr.mxu0 %v396
        %490 = vmatpush2.msra.mxu0 %v395
        %491 = vmatprep.subr.mxu0 %v394
        %492 = vmatpush2.msra.mxu0 %v393
        %493 = vmatprep.subr.mxu0 %v392
        %494 = vmatpush2.msra.mxu0 %v391
        %495 = vmatprep.subr.mxu0 %v390
        %496 = vmatpush2.msra.mxu0 %v389
        %497 = vmatprep.subr.mxu0 %v388
        %498 = vmatpush2.msra.mxu0 %v387
        %499 = vmatprep.subr.mxu0 %v386
        %500 = vmatpush2.msra.mxu0 %v385
        %501 = vmatprep.subr.mxu0 %v384
        %502 = vmatpush2.msra.mxu0 %v383
        %503 = vmatprep.subr.mxu0 %v382
        %504 = vmatpush2.msra.mxu0 %v381
        %505 = vmatprep.subr.mxu0 %v380
        %506 = vmatpush2.msra.mxu0 %v379
        %507 = vmatprep.mubr.f32.mxu0 %v345
        %508 = vmatmul.mubr.f32.gmra.mxu0 %v344
        %v509 = vpop.f32.mrf.mxu0
        %v510 = vadd.f32 0.0, %v509
        %v511 = vpop.f32.mrf.mxu0
        %v512 = vadd.f32 0.0, %v511
        %513 = vdwg.mxu0
        %514 = vmatprep.subr.mxu0 %v442
        %515 = vmatpush1.msra.mxu0 %v441
        %516 = vmatprep.subr.mxu0 %v440
        %517 = vmatpush1.msra.mxu0 %v439
        %518 = vmatprep.subr.mxu0 %v438
        %519 = vmatpush1.msra.mxu0 %v437
        %520 = vmatprep.subr.mxu0 %v436
        %521 = vmatpush1.msra.mxu0 %v435
        %522 = vmatprep.subr.mxu0 %v434
        %523 = vmatpush1.msra.mxu0 %v433
        %524 = vmatprep.subr.mxu0 %v432
        %525 = vmatpush1.msra.mxu0 %v431
        %526 = vmatprep.subr.mxu0 %v430
        %527 = vmatpush1.msra.mxu0 %v429
        %528 = vmatprep.subr.mxu0 %v428
        %529 = vmatpush1.msra.mxu0 %v427
        %530 = vmatprep.subr.mxu0 %v426
        %531 = vmatpush1.msra.mxu0 %v425
        %532 = vmatprep.subr.mxu0 %v424
        %533 = vmatpush1.msra.mxu0 %v423
        %534 = vmatprep.subr.mxu0 %v422
        %535 = vmatpush1.msra.mxu0 %v421
        %536 = vmatprep.subr.mxu0 %v420
        %537 = vmatpush1.msra.mxu0 %v419
        %538 = vmatprep.subr.mxu0 %v418
        %539 = vmatpush1.msra.mxu0 %v417
        %540 = vmatprep.subr.mxu0 %v416
        %541 = vmatpush1.msra.mxu0 %v415
        %542 = vmatprep.subr.mxu0 %v414
        %543 = vmatpush1.msra.mxu0 %v413
        %544 = vmatprep.subr.mxu0 %v412
        %545 = vmatpush1.msra.mxu0 %v411
        %546 = vmatprep.subr.mxu0 0.0
        %547 = vmatpush2.msra.mxu0 0.0
        %548 = vmatprep.subr.mxu0 0.0
        %549 = vmatpush2.msra.mxu0 0.0
        %550 = vmatprep.subr.mxu0 0.0
        %551 = vmatpush2.msra.mxu0 0.0
        %552 = vmatprep.subr.mxu0 0.0
        %553 = vmatpush2.msra.mxu0 0.0
        %554 = vmatprep.subr.mxu0 0.0
        %555 = vmatpush2.msra.mxu0 0.0
        %556 = vmatprep.subr.mxu0 0.0
        %557 = vmatpush2.msra.mxu0 0.0
        %558 = vmatprep.subr.mxu0 0.0
        %559 = vmatpush2.msra.mxu0 0.0
        %560 = vmatprep.subr.mxu0 0.0
        %561 = vmatpush2.msra.mxu0 0.0
        %562 = vmatprep.subr.mxu0 0.0
        %563 = vmatpush2.msra.mxu0 0.0
        %564 = vmatprep.subr.mxu0 0.0
        %565 = vmatpush2.msra.mxu0 0.0
        %566 = vmatprep.subr.mxu0 0.0
        %567 = vmatpush2.msra.mxu0 0.0
        %568 = vmatprep.subr.mxu0 0.0
        %569 = vmatpush2.msra.mxu0 0.0
        %570 = vmatprep.subr.mxu0 0.0
        %571 = vmatpush2.msra.mxu0 0.0
        %572 = vmatprep.subr.mxu0 0.0
        %573 = vmatpush2.msra.mxu0 0.0
        %574 = vmatprep.subr.mxu0 0.0
        %575 = vmatpush2.msra.mxu0 0.0
        %576 = vmatprep.subr.mxu0 0.0
        %577 = vmatpush2.msra.mxu0 0.0
        %578 = vmatprep.mubr.f32.mxu0 0.0
        %579 = vmatmul.mubr.f32.gmra.mxu0 %v346
        %v580 = vpop.f32.mrf.mxu0
        %v581 = vadd.f32 %v510, %v580
        %v582 = vpop.f32.mrf.mxu0
        %v583 = vadd.f32 %v512, %v582
        %584 = vdwg.mxu0
        %v585 = vadd.f32 %v342, %v581
        %v586 = vadd.f32 %v343, %v583
        %587 = vst [vmem:[#allocation2] sm:$0xff] %v585
        %588 = vst [vmem:[#allocation2 + $0x8] sm:$0xff] %v586
        %p589 = scmp.eq.s32.totalorder %s25, 2
        // Predicated region
        $region69: #{tpu_custom_call.1} parent=43 // pred_check
          %p590 = pneg %p589
        $region70: #{tpu_custom_call.1} parent=43 // pred_check_branch
          %592 = sbr.rel (%p590) target = $region72
        $region71: #{tpu_custom_call.1} parent=43 // pred_region
          %v593 = vld [vmem:[#allocation2] sm:$0xff]
          %v594 = vld [vmem:[#allocation2 + $0x8] sm:$0xff]
          %v595 = vrot.slane %v593, 4
          %v596 = vadd.f32 %v593, %v595
          %v597 = vrot.slane %v596, 2
          %v598 = vadd.f32 %v596, %v597
          %v599 = vrot.slane %v598, 1
          %v600 = vadd.f32 %v598, %v599
          %v601 = vrot.slane %v594, 4
          %v602 = vadd.f32 %v594, %v601
          %v603 = vrot.slane %v602, 2
          %v604 = vadd.f32 %v602, %v603
          %v605 = vrot.slane %v604, 1
          %v606 = vadd.f32 %v604, %v605
          %v607 = vrcp.pop 8.0
          %v608 = vmul.f32 %v600, %v607
          %v609 = vmul.f32 %v606, %v607
          %v610 = vsub.f32 %v593, %v608
          %v611 = vsub.f32 %v594, %v609
          %v612 = vmul.f32 %v610, %v610
          %v613 = vmul.f32 %v611, %v611
          %v614 = vrot.slane %v612, 4
          %v615 = vadd.f32 %v612, %v614
          %v616 = vrot.slane %v615, 2
          %v617 = vadd.f32 %v615, %v616
          %v618 = vrot.slane %v617, 1
          %v619 = vadd.f32 %v617, %v618
          %v620 = vrot.slane %v613, 4
          %v621 = vadd.f32 %v613, %v620
          %v622 = vrot.slane %v621, 2
          %v623 = vadd.f32 %v621, %v622
          %v624 = vrot.slane %v623, 1
          %v625 = vadd.f32 %v623, %v624
          %v626 = vmul.f32 %v619, %v607
          %v627 = vmul.f32 %v625, %v607
          %v628 = vld [vmem:[#allocation8] sm:$0x3]
          %v629 = vadd.f32 %v626, 1e-05
          %v630 = vadd.f32 %v627, 1e-05
          %v631 = vrsqrt.pop %v629
          %v632 = vrsqrt.pop %v630
          %v635 = vcombine.low %v631, %v632
          %v637 = vunpack.c.l.s4 1966171168
          %v638 = vunpack.c.0.s8 %v637
          %v639 = vlaneseq
          %v640 = vshrl.u32 %v639, 7
          %v641 = vsub.s32 %v638, %v640
          %v642 = vrot.slane %v635, %v641
          %v644 = vunpack.c.l.s4 1966171168
          %v645 = vunpack.c.0.s8 %v644
          %v646 = vlaneseq
          %v647 = vshrl.u32 %v646, 7
          %v648 = vsub.s32 %v645, %v647
          %v649 = vrot.slane %v642, %v648
          %v651 = vmul.f32 %v628, %v649
          %v653 = vlaneseq
          %v654 = vshrl.u32 %v653, 7
          %v655 = vsub.s32 0, %v654
          %v656 = vrot.slane %v651, %v655
          %v657 = vlaneseq
          %v658 = vshrl.u32 %v657, 7
          %v659 = vsub.s32 1, %v658
          %v660 = vrot.slane %v651, %v659
          %v663 = vmul.f32 %v610, %v656
          %v664 = vmul.f32 %v611, %v660
          %v665 = vld [vmem:[#allocation9] sm:$0x3]
          %v667 = vlaneseq
          %v668 = vshrl.u32 %v667, 7
          %v669 = vsub.s32 0, %v668
          %v670 = vrot.slane %v665, %v669
          %v671 = vlaneseq
          %v672 = vshrl.u32 %v671, 7
          %v673 = vsub.s32 1, %v672
          %v674 = vrot.slane %v665, %v673
          %v677 = vadd.f32 %v663, %v670
          %v678 = vadd.f32 %v664, %v674
          %vm679 = vcmp.gt.f32.partialorder %v677, 20.0
          %vm680 = vcmp.gt.f32.partialorder %v678, 20.0
          %v681 = vmin.f32 %v677, 20.0
          %v682 = vmin.f32 %v678, 20.0
          %v683 = vmul.f32 %v681, 1.442695
          %v684 = vpow.pop %v683
          %v685 = vmul.f32 %v682, 1.442695
          %v686 = vpow.pop %v685
          %v687 = vadd.f32 %v684, 1.0
          %v688 = vlog2.pop %v687
          %v689 = vmul.f32 %v688, 0.6931472
          %v690 = vmul.f32 -0.5, %v684
          %v691 = vadd.f32 %v690, 1.0
          %v692 = vmul.f32 %v691, %v684
          %v693 = vand.u32 2147483647, %v684
          %vm694 = vcmp.lt.f32.partialorder %v693, 0.0004427343
          %v695 = vsel %vm694, %v692, %v689
          %v696 = vadd.f32 %v686, 1.0
          %v697 = vlog2.pop %v696
          %v698 = vmul.f32 %v697, 0.6931472
          %v699 = vmul.f32 -0.5, %v686
          %v700 = vadd.f32 %v699, 1.0
          %v701 = vmul.f32 %v700, %v686
          %v702 = vand.u32 2147483647, %v686
          %vm703 = vcmp.lt.f32.partialorder %v702, 0.0004427343
          %v704 = vsel %vm703, %v701, %v698
          %v705 = vsel %vm679, %v677, %v695
          %v706 = vsel %vm680, %v678, %v704
          %v707 = vld [vmem:[%s4] sm:$0xff]
          %v708 = vld [vmem:[%s4 + $0x8] sm:$0xff]
          %v709 = vld [vmem:[%s4 + $0x10] sm:$0xff]
          %v710 = vld [vmem:[%s4 + $0x18] sm:$0xff]
          %v711 = vld [vmem:[%s4 + $0x20] sm:$0xff]
          %v712 = vld [vmem:[%s4 + $0x28] sm:$0xff]
          %v713 = vld [vmem:[%s4 + $0x30] sm:$0xff]
          %v714 = vld [vmem:[%s4 + $0x38] sm:$0xff]
          %v715 = vld [vmem:[%s4 + $0x40] sm:$0xff]
          %v716 = vld [vmem:[%s4 + $0x48] sm:$0xff]
          %v717 = vld [vmem:[%s4 + $0x50] sm:$0xff]
          %v718 = vld [vmem:[%s4 + $0x58] sm:$0xff]
          %v719 = vld [vmem:[%s4 + $0x60] sm:$0xff]
          %v720 = vld [vmem:[%s4 + $0x68] sm:$0xff]
          %v721 = vld [vmem:[%s4 + $0x70] sm:$0xff]
          %v722 = vld [vmem:[%s4 + $0x78] sm:$0xff]
          %v723 = vld [vmem:[%s4 + $0x80] sm:$0xff]
          %v724 = vld [vmem:[%s4 + $0x88] sm:$0xff]
          %v725 = vld [vmem:[%s4 + $0x90] sm:$0xff]
          %v726 = vld [vmem:[%s4 + $0x98] sm:$0xff]
          %v727 = vld [vmem:[%s4 + $0xa0] sm:$0xff]
          %v728 = vld [vmem:[%s4 + $0xa8] sm:$0xff]
          %v729 = vld [vmem:[%s4 + $0xb0] sm:$0xff]
          %v730 = vld [vmem:[%s4 + $0xb8] sm:$0xff]
          %v731 = vld [vmem:[%s4 + $0xc0] sm:$0xff]
          %v732 = vld [vmem:[%s4 + $0xc8] sm:$0xff]
          %v733 = vld [vmem:[%s4 + $0xd0] sm:$0xff]
          %v734 = vld [vmem:[%s4 + $0xd8] sm:$0xff]
          %v735 = vld [vmem:[%s4 + $0xe0] sm:$0xff]
          %v736 = vld [vmem:[%s4 + $0xe8] sm:$0xff]
          %v737 = vld [vmem:[%s4 + $0xf0] sm:$0xff]
          %v738 = vld [vmem:[%s4 + $0xf8] sm:$0xff]
          %v739 = vld [vmem:[#allocation11] sm:$0x1]
          %v741 = vlaneseq
          %v742 = vshrl.u32 %v741, 7
          %v743 = vsub.s32 0, %v742
          %v744 = vrot.slane %v739, %v743
          %746 = vmatprep.subr.mxu0 0.0
          %747 = vmatpush1.msra.mxu0 %v722
          %748 = vmatprep.subr.mxu0 0.0
          %749 = vmatpush1.msra.mxu0 %v721
          %750 = vmatprep.subr.mxu0 0.0
          %751 = vmatpush1.msra.mxu0 %v720
          %752 = vmatprep.subr.mxu0 0.0
          %753 = vmatpush1.msra.mxu0 %v719
          %754 = vmatprep.subr.mxu0 0.0
          %755 = vmatpush1.msra.mxu0 %v718
          %756 = vmatprep.subr.mxu0 0.0
          %757 = vmatpush1.msra.mxu0 %v717
          %758 = vmatprep.subr.mxu0 0.0
          %759 = vmatpush1.msra.mxu0 %v716
          %760 = vmatprep.subr.mxu0 0.0
          %761 = vmatpush1.msra.mxu0 %v715
          %762 = vmatprep.subr.mxu0 0.0
          %763 = vmatpush1.msra.mxu0 %v714
          %764 = vmatprep.subr.mxu0 0.0
          %765 = vmatpush1.msra.mxu0 %v713
          %766 = vmatprep.subr.mxu0 0.0
          %767 = vmatpush1.msra.mxu0 %v712
          %768 = vmatprep.subr.mxu0 0.0
          %769 = vmatpush1.msra.mxu0 %v711
          %770 = vmatprep.subr.mxu0 0.0
          %771 = vmatpush1.msra.mxu0 %v710
          %772 = vmatprep.subr.mxu0 0.0
          %773 = vmatpush1.msra.mxu0 %v709
          %774 = vmatprep.subr.mxu0 0.0
          %775 = vmatpush1.msra.mxu0 %v708
          %776 = vmatprep.subr.mxu0 0.0
          %777 = vmatpush1.msra.mxu0 %v707
          %778 = vmatprep.subr.mxu0 0.0
          %779 = vmatpush2.msra.mxu0 %v738
          %780 = vmatprep.subr.mxu0 0.0
          %781 = vmatpush2.msra.mxu0 %v737
          %782 = vmatprep.subr.mxu0 0.0
          %783 = vmatpush2.msra.mxu0 %v736
          %784 = vmatprep.subr.mxu0 0.0
          %785 = vmatpush2.msra.mxu0 %v735
          %786 = vmatprep.subr.mxu0 0.0
          %787 = vmatpush2.msra.mxu0 %v734
          %788 = vmatprep.subr.mxu0 0.0
          %789 = vmatpush2.msra.mxu0 %v733
          %790 = vmatprep.subr.mxu0 0.0
          %791 = vmatpush2.msra.mxu0 %v732
          %792 = vmatprep.subr.mxu0 0.0
          %793 = vmatpush2.msra.mxu0 %v731
          %794 = vmatprep.subr.mxu0 0.0
          %795 = vmatpush2.msra.mxu0 %v730
          %796 = vmatprep.subr.mxu0 0.0
          %797 = vmatpush2.msra.mxu0 %v729
          %798 = vmatprep.subr.mxu0 0.0
          %799 = vmatpush2.msra.mxu0 %v728
          %800 = vmatprep.subr.mxu0 0.0
          %801 = vmatpush2.msra.mxu0 %v727
          %802 = vmatprep.subr.mxu0 0.0
          %803 = vmatpush2.msra.mxu0 %v726
          %804 = vmatprep.subr.mxu0 0.0
          %805 = vmatpush2.msra.mxu0 %v725
          %806 = vmatprep.subr.mxu0 0.0
          %807 = vmatpush2.msra.mxu0 %v724
          %808 = vmatprep.subr.mxu0 0.0
          %809 = vmatpush2.msra.mxu0 %v723
          %810 = vmatprep.mubr.f32.mxu0 %v706
          %811 = vmatmul.mubr.f32.gmra.mxu0 %v705
          %v812 = vpop.f32.mrf.mxu0
          %v813 = vadd.f32 %v744, %v812
          %v814 = vpop.f32.mrf.mxu0
          %815 = vdwg.mxu0
          %vm816 = vcmask 80896
          %v817 = vsel %vm816, %v813, -inf
          %818 = vmax.xlane.f32.xlu0 %v817
          %v819 = vpop.xlane.xlu0 %818
          %v820 = vsub.f32 %v813, %v819
          %v821 = vmul.f32 %v820, 1.442695
          %v822 = vpow.pop %v821
          %v823 = vsel %vm816, %v822, 0.0
          %824 = vadd.xlane.f32.xlu0 %v823
          %v825 = vpop.xlane.xlu0 %824
          %v826 = vrcp.pop %v825
          %v827 = vmul.f32 %v822, %v826
          %828 = vst.msk [vmem:[#allocation12] sm:$0xff] %vm816, %v827
        $region72: #{tpu_custom_call.1} parent=43 // pred_fallthru
          _
        // Predicated region
        $region73: #{tpu_custom_call.1} parent=43 // pred_check
          %p829 = pneg %p174
        $region74: #{tpu_custom_call.1} parent=43 // pred_check_branch
          %831 = sbr.rel (%p829) target = $region76
        $region75: #{tpu_custom_call.1} parent=43 // pred_region
          %s833 = ssub.s32 128, 128
          %834 = vsyncadd [#allocation5], %s833
          %s836 = sshll.u32 [#allocation12], 4
          %s837 = int_to_ptr.vmem [resolvable:$true] %s836
          %839 = dma.vmem_to_hbm [thread:$0]  %s837, 128, %s6, [#allocation5]
        $region76: #{tpu_custom_call.1} parent=43 // pred_fallthru
          _
        // Predicated region
        $region77: #{tpu_custom_call.1} parent=43 // pred_check
          %p840 = pneg %p174
        $region78: #{tpu_custom_call.1} parent=43 // pred_check_branch
          %842 = sbr.rel (%p840) target = $region80
        $region79: #{tpu_custom_call.1} parent=43 // pred_region
          %843 = dma.done [#allocation5], 128
        $region80: #{tpu_custom_call.1} parent=43 // pred_fallthru
          _
      $region44: #{tpu_custom_call.1} parent=5 // pred_fallthru
        _
      %p844 = scmp.le.s32.totalorder 2, %s20
      // Predicated region
      $region81: #{tpu_custom_call.1} parent=5 // pred_check
        %p845 = pneg %p844
      $region82: #{tpu_custom_call.1} parent=5 // pred_check_branch
        %847 = sbr.rel (%p845) target = $region84
      $region83: #{tpu_custom_call.1} parent=5 // pred_region
        %s848 = ssub.s32 %s20, 2
      $region84: #{tpu_custom_call.1} parent=5 // pred_fallthru
        _
    $region6: #{tpu_custom_call.1} parent=1 // loop_footer
      %s24 = sadd.s32 1, %s20
    $region7: #{tpu_custom_call.1} parent=1 // loop_footer_branch
      %19 = sbr.rel target = $region3
    $region8: #{tpu_custom_call.1} parent=1 // loop_exit
      _
    %849 = vsyncpa [#allocation4], 1
    %s850 = scalar_lea.sflag [#allocation4], 1
    %851 = vsyncpa %s850, 1
    %852 = vsyncpa [#allocation7], 1
    %s853 = scalar_lea.sflag [#allocation7], 1
    %854 = vsyncpa %s853, 1
    %855 = vsyncpa [#allocation10], 1
    %856 = vsyncpa [#allocation5], 1
    %s857 = scalar_lea.sflag [#allocation5], 1
    %858 = vsyncpa %s857, 1

</llo_original>
